<compile_context>
chip_gen: v7x
topology: tpu7x:2x2x1
jax: 0.10.0
libtpu: 0.0.40
codegen_flags: <defaults>
</compile_context>

<pallas_src>
import functools
import math

import jax
import jax.numpy as jnp
from jax.experimental import pallas as pl
from jax.experimental.pallas import tpu as pltpu


def _gauss_taps_1d(size, sigma):
    """Normalized 1-D gaussian taps as Python floats (trace-time constants)."""
    ax = [i - (size - 1) / 2.0 for i in range(size)]
    e = [math.exp(-(a * a) / (2.0 * sigma * sigma)) for a in ax]
    z = sum(e)
    return tuple(v / z for v in e)


def gauss_kernel_weights(size, sigma, in_channels, out_channels, dtype=jnp.float32):
    """Dense conv2d weight (C_out, C_in, size, size); mirrors the repo's numpy
    `gauss_kernel`.  Used only by the pure-JAX reference check."""
    ax = jnp.arange(size, dtype=jnp.float32) - (size - 1) / 2.0
    xx, yy = jnp.meshgrid(ax, ax)
    g = jnp.exp(-(xx ** 2 + yy ** 2) / (2.0 * sigma ** 2))
    g = g / jnp.sum(g)
    return jnp.tile(g[None, None, :, :], (out_channels, in_channels, 1, 1)).astype(dtype)


def _blur_kernel(x_ref, o_ref, *, taps, pad, stride):
    """One block of batch images per grid step.

    x_ref: (bn, C_in, H, W)     raw (unpadded) input block
    o_ref: (bn, C_out, Ho, Wo)  blurred output block
    """
    bn, _, h, w = x_ref.shape
    _, c_out, h_out, w_out = o_ref.shape
    k = len(taps)

    x = x_ref[...].astype(jnp.float32)

    # Rank-1 channel collapse: every (o, i) weight slice is identical, so the
    # input-channel contraction is just a channel sum followed by ONE blur.
    s = jnp.sum(x, axis=1)                                          # (bn, H, W)

    # Reflection pad (no edge repeat), built from static row/col slices in VMEM.
    # Avoids writing + re-reading a padded copy of the input through HBM.
    if pad > 0:
        top = [s[:, i:i + 1, :] for i in range(pad, 0, -1)]           # rows pad..1
        bot = [s[:, h - 1 - i:h - i, :] for i in range(1, pad + 1)]   # rows H-2..H-1-pad
        s = jnp.concatenate(top + [s] + bot, axis=1)                  # (bn, Hp, W)
        left = [s[:, :, j:j + 1] for j in range(pad, 0, -1)]
        right = [s[:, :, w - 1 - j:w - j] for j in range(1, pad + 1)]
        s = jnp.concatenate(left + [s] + right, axis=2)               # (bn, Hp, Wp)

    hp, wp = h + 2 * pad, w + 2 * pad
    hf, wf = hp - k + 1, wp - k + 1     # full-resolution (stride-1) output dims

    # Separable gaussian: K vertical taps (sublane shifts) then K horizontal
    # taps (lane shifts).  Taps are scalar immediates -> pure VPU scalar FMAs.
    v = taps[0] * s[:, 0:hf, :]
    for ky in range(1, k):
        v = v + taps[ky] * s[:, ky:ky + hf, :]                        # (bn, Hf, Wp)
    o = taps[0] * v[:, :, 0:wf]
    for kx in range(1, k):
        o = o + taps[kx] * v[:, :, kx:kx + wf]                        # (bn, Hf, Wf)

    if stride > 1:
        # Single subsample at the very end keeps the tap loops shuffle-free.
        o = o[:, ::stride, ::stride]                                  # (bn, Ho, Wo)

    # Every output channel is the same blurred plane.
    o_ref[...] = jnp.broadcast_to(
        o[:, None, :, :], (bn, c_out, h_out, w_out)).astype(o_ref.dtype)


def _pick_block_n(n, per_image_bytes, target_bytes=4 << 20):
    """Batch-block size: big enough to amortize the ~0.35us per-grid-step cost,
    small enough to stay well inside scoped VMEM with double buffering (safe on
    v7x's 32 MiB default), and keeping >= 2 grid steps whenever possible so
    v7x's two TensorCores both get work (the batch axis is 'parallel')."""
    cap = max(1, target_bytes // max(per_image_bytes, 1))
    if n >= 2:
        cap = min(cap, n // 2)
    cap = max(1, min(cap, n))
    for bn in range(cap, 0, -1):        # largest divisor of n not above cap
        if n % bn == 0:
            return bn
    return 1


def gaussian_blur_layer(x, *, size, sigma, stride=1, padding=1):
    """Forward pass of GaussianBlurLayer.  x: (N, C, H, W) NCHW."""
    n, c, h, w = x.shape
    h_out = (h + 2 * padding - size) // stride + 1
    w_out = (w + 2 * padding - size) // stride + 1

    taps = _gauss_taps_1d(size, sigma)          # static -> scalar immediates
    bn = _pick_block_n(n, c * h * w * x.dtype.itemsize)

    kernel = functools.partial(_blur_kernel, taps=taps, pad=padding, stride=stride)

    # NOTE: for realistic inpainting sizes (W >= 128) the output block is already
    # lane-dense; the tiny 16-wide demo output keeps its 2-D (Ho, Wo) layout
    # rather than risking an in-kernel sublane->lane flatten.
    out = pl.pallas_call(
        kernel,
        out_shape=jax.ShapeDtypeStruct((n, c, h_out, w_out), x.dtype),
        grid=(n // bn,),
        in_specs=[pl.BlockSpec((bn, c, h, w), lambda b: (b, 0, 0, 0))],
        out_specs=pl.BlockSpec((bn, c, h_out, w_out), lambda b: (b, 0, 0, 0)),
        compiler_params=pltpu.CompilerParams(dimension_semantics=("parallel",)),
    )(x)
    return out


def _reference(x, *, size, sigma, stride=1, padding=1):
    """Pure-JAX reference (reflection pad + dense conv2d) for verification."""
    xp = jnp.pad(
        x, ((0, 0), (0, 0), (padding, padding), (padding, padding)), mode="reflect"
    )
    wgt = gauss_kernel_weights(size, sigma, x.shape[1], x.shape[1], dtype=x.dtype)
    return jax.lax.conv_general_dilated(
        xp, wgt, window_strides=(stride, stride), padding="VALID",
        dimension_numbers=("NCHW", "OIHW", "NCHW"),
    )


if __name__ == "__main__":
    # Module config: size=3, sigma=1.0, in_channel=4, stride=1, padding=1
    SIZE, SIGMA, STRIDE, PAD = 3, 1.0, 1, 1

    key = jax.random.PRNGKey(0)
    x = jax.random.normal(key, (2, 4, 16, 16), dtype=jnp.float32)

    out = gaussian_blur_layer(x, size=SIZE, sigma=SIGMA, stride=STRIDE, padding=PAD)
    out = jax.block_until_ready(out)

    ref = _reference(x, size=SIZE, sigma=SIGMA, stride=STRIDE, padding=PAD)
    assert out.shape == ref.shape, (out.shape, ref.shape)
    assert jnp.allclose(out, ref, atol=1e-4, rtol=1e-4), "mismatch vs reference conv"

    print("KERNEL_OK")
</pallas_src>

<mosaic_0001>
module attributes {stable_mosaic.version = 11 : i64} {
  func.func @_blur_kernel(%arg0: i32, %arg1: memref<1x4x16x16xf32, #tpu.memory_space<vmem>>, %arg2: memref<1x4x16x16xf32, #tpu.memory_space<vmem>>) attributes {dimension_semantics = [#tpu.dimension_semantics<parallel>], iteration_bounds = array<i64: 2>, scalar_prefetch = 0 : i64, scratch_operands = 0 : i64, tpu.core_type = #tpu.core_type<tc>, window_params = [{transform_indices = @transform_0, window_bounds = array<i64: 1, 4, 16, 16>}, {transform_indices = @transform_1, window_bounds = array<i64: 1, 4, 16, 16>}]} {
    %c0 = arith.constant 0 : index
    %c0_0 = arith.constant 0 : index
    %c0_1 = arith.constant 0 : index
    %c0_2 = arith.constant 0 : index
    %0 = vector.load %arg1[%c0, %c0_0, %c0_1, %c0_2] : memref<1x4x16x16xf32, #tpu.memory_space<vmem>>, vector<1x4x16x16xf32>
    %cst = arith.constant dense<0.000000e+00> : vector<1x16x16xf32>
    %1 = vector.multi_reduction <add>, %0, %cst [1] : vector<1x4x16x16xf32> to vector<1x16x16xf32>
    %2 = vector.extract_strided_slice %1 {offsets = [0, 1, 0], sizes = [1, 1, 16], strides = [1, 1, 1]} : vector<1x16x16xf32> to vector<1x1x16xf32>
    %3 = vector.extract_strided_slice %1 {offsets = [0, 14, 0], sizes = [1, 1, 16], strides = [1, 1, 1]} : vector<1x16x16xf32> to vector<1x1x16xf32>
    %4 = tpu.concatenate %2, %1, %3 in 1 : vector<1x1x16xf32>, vector<1x16x16xf32>, vector<1x1x16xf32> -> vector<1x18x16xf32>
    %5 = vector.extract_strided_slice %4 {offsets = [0, 0, 1], sizes = [1, 18, 1], strides = [1, 1, 1]} : vector<1x18x16xf32> to vector<1x18x1xf32>
    %6 = vector.extract_strided_slice %4 {offsets = [0, 0, 14], sizes = [1, 18, 1], strides = [1, 1, 1]} : vector<1x18x16xf32> to vector<1x18x1xf32>
    %7 = tpu.concatenate %5, %4, %6 in 2 : vector<1x18x1xf32>, vector<1x18x16xf32>, vector<1x18x1xf32> -> vector<1x18x18xf32>
    %8 = vector.extract_strided_slice %7 {offsets = [0, 0, 0], sizes = [1, 16, 18], strides = [1, 1, 1]} : vector<1x18x18xf32> to vector<1x16x18xf32>
    %cst_3 = arith.constant 0.274068624 : f32
    %9 = vector.broadcast %cst_3 : f32 to vector<1x16x18xf32>
    %10 = arith.mulf %9, %8 : vector<1x16x18xf32>
    %11 = vector.extract_strided_slice %7 {offsets = [0, 1, 0], sizes = [1, 16, 18], strides = [1, 1, 1]} : vector<1x18x18xf32> to vector<1x16x18xf32>
    %cst_4 = arith.constant 0.451862752 : f32
    %12 = vector.broadcast %cst_4 : f32 to vector<1x16x18xf32>
    %13 = arith.mulf %12, %11 : vector<1x16x18xf32>
    %14 = arith.addf %10, %13 : vector<1x16x18xf32>
    %15 = vector.extract_strided_slice %7 {offsets = [0, 2, 0], sizes = [1, 16, 18], strides = [1, 1, 1]} : vector<1x18x18xf32> to vector<1x16x18xf32>
    %cst_5 = arith.constant 0.274068624 : f32
    %16 = vector.broadcast %cst_5 : f32 to vector<1x16x18xf32>
    %17 = arith.mulf %16, %15 : vector<1x16x18xf32>
    %18 = arith.addf %14, %17 : vector<1x16x18xf32>
    %19 = vector.extract_strided_slice %18 {offsets = [0, 0, 0], sizes = [1, 16, 16], strides = [1, 1, 1]} : vector<1x16x18xf32> to vector<1x16x16xf32>
    %cst_6 = arith.constant 0.274068624 : f32
    %20 = vector.broadcast %cst_6 : f32 to vector<1x16x16xf32>
    %21 = arith.mulf %20, %19 : vector<1x16x16xf32>
    %22 = vector.extract_strided_slice %18 {offsets = [0, 0, 1], sizes = [1, 16, 16], strides = [1, 1, 1]} : vector<1x16x18xf32> to vector<1x16x16xf32>
    %cst_7 = arith.constant 0.451862752 : f32
    %23 = vector.broadcast %cst_7 : f32 to vector<1x16x16xf32>
    %24 = arith.mulf %23, %22 : vector<1x16x16xf32>
    %25 = arith.addf %21, %24 : vector<1x16x16xf32>
    %26 = vector.extract_strided_slice %18 {offsets = [0, 0, 2], sizes = [1, 16, 16], strides = [1, 1, 1]} : vector<1x16x18xf32> to vector<1x16x16xf32>
    %cst_8 = arith.constant 0.274068624 : f32
    %27 = vector.broadcast %cst_8 : f32 to vector<1x16x16xf32>
    %28 = arith.mulf %27, %26 : vector<1x16x16xf32>
    %29 = arith.addf %25, %28 : vector<1x16x16xf32>
    %30 = vector.shape_cast %29 : vector<1x16x16xf32> to vector<1x1x16x16xf32>
    %31 = vector.shape_cast %30 : vector<1x1x16x16xf32> to vector<1x1x16x16xf32>
    %32 = vector.broadcast %31 : vector<1x1x16x16xf32> to vector<1x4x16x16xf32>
    %c0_9 = arith.constant 0 : index
    %c0_10 = arith.constant 0 : index
    %c0_11 = arith.constant 0 : index
    %c0_12 = arith.constant 0 : index
    %33 = vector.load %arg2[%c0_9, %c0_10, %c0_11, %c0_12] : memref<1x4x16x16xf32, #tpu.memory_space<vmem>>, vector<1x4x16x16xf32>
    tpu.vector_store %arg2[%c0_9, %c0_10, %c0_11, %c0_12], %32 {strides = array<i32>} : memref<1x4x16x16xf32, #tpu.memory_space<vmem>>, vector<1x4x16x16xf32>,
    return
  }
  func.func @transform_0(%arg0: i32) -> (i32, i32, i32, i32) {
    %c0_i32 = arith.constant 0 : i32
    %c0_i32_0 = arith.constant 0 : i32
    %c0_i32_1 = arith.constant 0 : i32
    %c0_i32_2 = arith.constant 0 : i32
    return %arg0, %c0_i32, %c0_i32_0, %c0_i32_1 : i32, i32, i32, i32
  }
  func.func @transform_1(%arg0: i32) -> (i32, i32, i32, i32) {
    %c0_i32 = arith.constant 0 : i32
    %c0_i32_0 = arith.constant 0 : i32
    %c0_i32_1 = arith.constant 0 : i32
    %c0_i32_2 = arith.constant 0 : i32
    return %arg0, %c0_i32, %c0_i32_0, %c0_i32_1 : i32, i32, i32, i32
  }
}

</mosaic_0001>

<llo_original>
// kernel: tpu_custom_call.1
$region0: #{tpu_custom_call.1}
  #allocation0 [shape = 'u32[]', space=smem, size = 0x4, offset = 0x4, fixed_abs, tag = 'smem constant byte address 0x4 - core index']
  #allocation1 [shape = 'u32[144,128]{1,0:T(1,128)}', space=vmem, size = 0x12000, scoped, tag = 'internal scratch']
  %s0 = inlined_call_operand.hbm [shape: f32[2,4,16,16], index: 0, kind: input, shape index: {}]
  %s1 = inlined_call_operand.hbm [shape: f32[2,4,16,16], index: 1, kind: output, shape index: {}]
  %s2 = sld [smem:[#allocation0]]
  $region41: #{tpu_custom_call.1} parent=0
    _
  %s4 = ssub.s32 1, %s2
  %s5 = scalar_select 0, %s4, %s2
  $region1: #{tpu_custom_call.1} parent=0
    #allocation2 [shape = 'u8[65536]{0}', space=vmem, size = 0x10000, scoped, tag = 'input window, operand 0']
    #allocation3 [shape = 's32[2]{0}', space=sflag, size = 0x8, scoped, tag = 'scoped memory for tpu_custom_call.1']
    #allocation4 [shape = 's32[2]{0}', space=sflag, size = 0x8, scoped, tag = 'scoped memory for tpu_custom_call.1']
    #allocation5 [shape = 'u8[65536]{0}', space=vmem, size = 0x10000, scoped, tag = 'output window, operand 0']
    %6 = vsyncpa [#allocation3], 0
    %s7 = scalar_lea.sflag [#allocation3], 1
    %8 = vsyncpa %s7, 0
    %9 = vsyncpa [#allocation4], 0
    %s10 = scalar_lea.sflag [#allocation4], 1
    %11 = vsyncpa %s10, 0
    loop: start=0, step=1, limit=4
    $region2: #{tpu_custom_call.1} parent=1 // loop_pre_header
      _
    $region3: #{tpu_custom_call.1} parent=1 // loop_header
      %s13 = sphi 0, %s17
      %p14 = scmp.ge.s32.totalorder %s13, 4
      %s23 = sphi 0, %s25
      %s26 = sphi 0, %s23
      %s27 = sphi 0, %s26
      %s43 = sphi 0, %s27
      %s49 = sphi 0, %s51
      %s52 = sphi 0, %s49
      %s53 = sphi 0, %s52
      %s69 = sphi 0, %s53
    $region4: #{tpu_custom_call.1} parent=1 // loop_header_branch
      %16 = sbr.rel (%p14) target = $region8
    $region5: #{tpu_custom_call.1} parent=1 // loop_body
      %s18 = ssub.s32 %s13, 1
      %s19 = ssub.s32 %s13, 2
      %s20 = sadd.s32 %s13, 1
      %s21 = ssub.s32 %s13, %s20
      %p22 = scmp.eq.s32.totalorder %s21, 0
      %s24 = sadd.s32 %s23, 1
      %s25 = scalar_select %p22, %s23, %s24
      %p28 = pneg %p22
      %p29 = scmp.eq.s32.totalorder %s13, 1
      %p30 = por %p28, %p29
      %p31 = scmp.ne.s32.totalorder %s23, %s26
      %p32 = scmp.eq.s32.totalorder %s13, 0
      %p33 = por %p31, %p32
      %p34 = scmp.ne.s32.totalorder %s23, %s26
      %p35 = scmp.eq.s32.totalorder %s18, 1
      %p36 = por %p34, %p35
      %p37 = scmp.ne.s32.totalorder %s26, %s27
      %p38 = scmp.eq.s32.totalorder %s18, 0
      %p39 = por %p37, %p38
      %p40 = scmp.ne.s32.totalorder %s26, %s27
      %p41 = scmp.eq.s32.totalorder %s19, 1
      %p42 = por %p40, %p41
      %p44 = scmp.ne.s32.totalorder %s27, %s43
      %p45 = scmp.eq.s32.totalorder %s19, 0
      %p46 = por %p44, %p45
      %s47 = ssub.s32 %s13, %s20
      %p48 = scmp.eq.s32.totalorder %s47, 0
      %s50 = sadd.s32 %s49, 1
      %s51 = scalar_select %p48, %s49, %s50
      %p54 = pneg %p48
      %p55 = scmp.eq.s32.totalorder %s13, 1
      %p56 = por %p54, %p55
      %p57 = scmp.ne.s32.totalorder %s49, %s52
      %p58 = scmp.eq.s32.totalorder %s13, 0
      %p59 = por %p57, %p58
      %p60 = scmp.ne.s32.totalorder %s49, %s52
      %p61 = scmp.eq.s32.totalorder %s18, 1
      %p62 = por %p60, %p61
      %p63 = scmp.ne.s32.totalorder %s52, %s53
      %p64 = scmp.eq.s32.totalorder %s18, 0
      %p65 = por %p63, %p64
      %p66 = scmp.ne.s32.totalorder %s52, %s53
      %p67 = scmp.eq.s32.totalorder %s19, 1
      %p68 = por %p66, %p67
      %p70 = scmp.ne.s32.totalorder %s53, %s69
      %p71 = scmp.eq.s32.totalorder %s19, 0
      %p72 = por %p70, %p71
      %p73 = scmp.le.s32.totalorder 1, %s13
      %p74 = scmp.lt.s32.totalorder %s13, 3
      %p75 = pnand %p73, %p74
      %p76 = pneg %p75
      // Predicated region
      $region9: #{tpu_custom_call.1} parent=5 // pred_check
        _
      $region10: #{tpu_custom_call.1} parent=5 // pred_check_branch
        %78 = sbr.rel (%p75) target = $region12
      $region11: #{tpu_custom_call.1} parent=5 // pred_region
        %s79 = ssub.s32 %s13, 1
      $region12: #{tpu_custom_call.1} parent=5 // pred_fallthru
        _
      %p80 = scmp.lt.s32.totalorder %s13, 2
      // Predicated region
      $region13: #{tpu_custom_call.1} parent=5 // pred_check
        %p81 = pneg %p80
      $region14: #{tpu_custom_call.1} parent=5 // pred_check_branch
        %83 = sbr.rel (%p81) target = $region16
      $region15: #{tpu_custom_call.1} parent=5 // pred_region
        // Predicated region
        $region17: #{tpu_custom_call.1} parent=15 // pred_check
          %p84 = pneg %p33
        $region18: #{tpu_custom_call.1} parent=15 // pred_check_branch
          %86 = sbr.rel (%p84) target = $region20
        $region19: #{tpu_custom_call.1} parent=15 // pred_region
          %s87 = sand.u32 %s23, 1
          %s88 = scalar_lea.sflag [#allocation3], %s87
          %s89 = sand.u32 %s23, 1
          %s90 = smul.addr %s89, 64
          %s91 = scalar_lea.vmem [#allocation2], %s90
          %s93 = ssub.s32 1024, 1024
          %94 = vsyncadd %s88, %s93
          %s95 = smul.addr %s13, 8
          %s96 = smul.addr %s95, 128
          %s97 = scalar_lea.hbm %s0, %s96
          %s98 = sshll.u32 %s91, 4
          %s99 = int_to_ptr.vmem [resolvable:$true] %s98
          %104 = dma.hbm_to_vmem [thread:$0]  %s97, 1024, %s99, %s88, 128, 128, 8
        $region20: #{tpu_custom_call.1} parent=15 // pred_fallthru
          _
      $region16: #{tpu_custom_call.1} parent=5 // pred_fallthru
        _
      %p105 = scmp.le.s32.totalorder 1, %s13
      %p106 = scmp.lt.s32.totalorder %s13, 3
      %p107 = pnand %p105, %p106
      %p108 = pneg %p107
      // Predicated region
      $region21: #{tpu_custom_call.1} parent=5 // pred_check
        _
      $region22: #{tpu_custom_call.1} parent=5 // pred_check_branch
        %110 = sbr.rel (%p107) target = $region24
      $region23: #{tpu_custom_call.1} parent=5 // pred_region
        %s111 = ssub.s32 %s13, 1
        %s112 = sand.u32 %s26, 1
        %s113 = scalar_lea.sflag [#allocation3], %s112
        %s114 = sand.u32 %s26, 1
        %s115 = smul.addr %s114, 64
        %s116 = scalar_lea.vmem [#allocation2], %s115
        // Predicated region
        $region25: #{tpu_custom_call.1} parent=23 // pred_check
          %p117 = pneg %p39
        $region26: #{tpu_custom_call.1} parent=23 // pred_check_branch
          %119 = sbr.rel (%p117) target = $region28
        $region27: #{tpu_custom_call.1} parent=23 // pred_region
          %120 = dma.done %s113, 1024
        $region28: #{tpu_custom_call.1} parent=23 // pred_fallthru
          _
        %s121 = sand.u32 %s26, 1
        %s122 = scalar_lea.sflag [#allocation3], %s121
        %s123 = sand.u32 %s26, 1
        %s124 = smul.addr %s123, 64
        %s125 = scalar_lea.vmem [#allocation2], %s124
        %p126 = pneg %p39
        %p127 = pneg %p36
        %p128 = pneg %p65
        %p129 = pneg %p62
        %s130 = sand.u32 %s52, 1
        %s131 = scalar_lea.sflag [#allocation4], %s130
        %s132 = sand.u32 %s52, 1
        %s133 = smul.addr %s132, 64
        %s134 = scalar_lea.vmem [#allocation5], %s133
        %v135 = vld [vmem:[%s116] sm:$0xff]
        %v136 = vld [vmem:[%s116 + $0x8] sm:$0xff]
        %v137 = vld [vmem:[%s116 + $0x10] sm:$0xff]
        %v138 = vld [vmem:[%s116 + $0x18] sm:$0xff]
        %v139 = vld [vmem:[%s116 + $0x20] sm:$0xff]
        %v140 = vld [vmem:[%s116 + $0x28] sm:$0xff]
        %v141 = vld [vmem:[%s116 + $0x30] sm:$0xff]
        %v142 = vld [vmem:[%s116 + $0x38] sm:$0xff]
        %vm143 = vcmask 130048
        %v144 = vsel %vm143, %v135, 0.0
        %v145 = vsel %vm143, %v137, 0.0
        %v146 = vadd.f32 %v144, %v145
        %v147 = vsel %vm143, %v139, 0.0
        %v148 = vadd.f32 %v146, %v147
        %v149 = vsel %vm143, %v141, 0.0
        %v150 = vadd.f32 %v148, %v149
        %v151 = vsel %vm143, %v136, 0.0
        %v152 = vsel %vm143, %v138, 0.0
        %v153 = vadd.f32 %v151, %v152
        %v154 = vsel %vm143, %v140, 0.0
        %v155 = vadd.f32 %v153, %v154
        %v156 = vsel %vm143, %v142, 0.0
        %v157 = vadd.f32 %v155, %v156
        %v159 = vrot.slane %v150, 1
        %vm162 = vcmask 1040384
        %v163 = vrot.slane %v150, 7
        %v164 = vrot.slane %v157, 7
        %v165 = vsel %vm162, %v163, %v164
        %v168 = vrot.slane %v157, 5
        %v170 = vsel %vm162, %v159, %v163
        %v171 = vsel %vm162, %v164, %v168
        %174 = vrot.lane.b32.xlu0 %v170, 127
        %v175 = vpop.permute.xlu0 %174
        %176 = vrot.lane.b32.xlu0 %v165, 127
        %v177 = vpop.permute.xlu0 %176
        %178 = vrot.lane.b32.xlu0 %v171, 127
        %v179 = vpop.permute.xlu0 %178
        %183 = vrot.lane.b32.xlu0 %v170, 1
        %v184 = vpop.permute.xlu0 %183
        %185 = vrot.lane.b32.xlu0 %v165, 1
        %v186 = vpop.permute.xlu0 %185
        %187 = vrot.lane.b32.xlu0 %v171, 1
        %v188 = vpop.permute.xlu0 %187
        %192 = vrot.lane.b32.xlu0 %v170, 3
        %v193 = vpop.permute.xlu0 %192
        %194 = vrot.lane.b32.xlu0 %v165, 3
        %v195 = vpop.permute.xlu0 %194
        %196 = vrot.lane.b32.xlu0 %v171, 3
        %v197 = vpop.permute.xlu0 %196
        %vm201 = vcmask 7168
        %v202 = vsel %vm201, %v175, %v184
        %v203 = vsel %vm201, %v177, %v186
        %v204 = vsel %vm201, %v179, %v188
        %vm205 = vcmask 138240
        %v206 = vsel %vm205, %v202, %v193
        %v207 = vsel %vm205, %v203, %v195
        %v208 = vsel %vm205, %v204, %v197
        %v209 = vmul.f32 %v206, 0.27406862
        %v210 = vmul.f32 %v207, 0.27406862
        %v211 = vmul.f32 %v206, 0.45186275
        %v212 = vmul.f32 %v207, 0.45186275
        %v213 = vmul.f32 %v208, 0.45186275
        %vm217 = vcmask 1046528
        %v218 = vrot.slane %v211, 1
        %v219 = vrot.slane %v212, 1
        %v220 = vsel %vm217, %v218, %v219
        %v221 = vrot.slane %v213, 1
        %v222 = vsel %vm217, %v219, %v221
        %v225 = vadd.f32 %v209, %v220
        %v226 = vadd.f32 %v210, %v222
        %v227 = vmul.f32 %v208, 0.27406862
        %vm231 = vcmask 1045504
        %v232 = vrot.slane %v209, 2
        %v233 = vrot.slane %v210, 2
        %v234 = vsel %vm231, %v232, %v233
        %v235 = vrot.slane %v227, 2
        %v236 = vsel %vm231, %v233, %v235
        %v239 = vadd.f32 %v225, %v234
        %v240 = vadd.f32 %v226, %v236
        %v241 = vmul.f32 %v239, 0.27406862
        %v242 = vmul.f32 %v240, 0.27406862
        %v243 = vmul.f32 %v239, 0.45186275
        %v244 = vmul.f32 %v240, 0.45186275
        %247 = vrot.lane.b32.xlu0 %v243, 127
        %v248 = vpop.permute.xlu0 %247
        %249 = vrot.lane.b32.xlu0 %v244, 127
        %v250 = vpop.permute.xlu0 %249
        %v253 = vadd.f32 %v241, %v248
        %v254 = vadd.f32 %v242, %v250
        %257 = vrot.lane.b32.xlu0 %v241, 126
        %v258 = vpop.permute.xlu0 %257
        %259 = vrot.lane.b32.xlu0 %v242, 126
        %v260 = vpop.permute.xlu0 %259
        %v263 = vadd.f32 %v253, %v258
        %v264 = vadd.f32 %v254, %v260
        %265 = vst.msk [vmem:[%s134] sm:$0xff] %vm143, %v263
        %266 = vst.msk [vmem:[%s134 + $0x8] sm:$0xff] %vm143, %v264
        %267 = vst.msk [vmem:[%s134 + $0x10] sm:$0xff] %vm143, %v263
        %268 = vst.msk [vmem:[%s134 + $0x18] sm:$0xff] %vm143, %v264
        %269 = vst.msk [vmem:[%s134 + $0x20] sm:$0xff] %vm143, %v263
        %270 = vst.msk [vmem:[%s134 + $0x28] sm:$0xff] %vm143, %v264
        %271 = vst.msk [vmem:[%s134 + $0x30] sm:$0xff] %vm143, %v263
        %272 = vst.msk [vmem:[%s134 + $0x38] sm:$0xff] %vm143, %v264
        %s273 = sand.u32 %s52, 1
        %s274 = scalar_lea.sflag [#allocation4], %s273
        %s275 = sand.u32 %s52, 1
        %s276 = smul.addr %s275, 64
        %s277 = scalar_lea.vmem [#allocation5], %s276
        // Predicated region
        $region29: #{tpu_custom_call.1} parent=23 // pred_check
          %p278 = pneg %p62
        $region30: #{tpu_custom_call.1} parent=23 // pred_check_branch
          %280 = sbr.rel (%p278) target = $region32
        $region31: #{tpu_custom_call.1} parent=23 // pred_region
          %s282 = ssub.s32 1024, 1024
          %283 = vsyncadd %s274, %s282
          %s284 = smul.addr %s18, 8
          %s285 = smul.addr %s284, 128
          %s286 = scalar_lea.hbm %s1, %s285
          %s287 = sshll.u32 %s277, 4
          %s288 = int_to_ptr.vmem [resolvable:$true] %s287
          %293 = dma.vmem_to_hbm [thread:$0]  %s288, 1024, %s286, %s274, 128, 128, 8
        $region32: #{tpu_custom_call.1} parent=23 // pred_fallthru
          _
      $region24: #{tpu_custom_call.1} parent=5 // pred_fallthru
        _
      %p294 = scmp.le.s32.totalorder 2, %s13
      // Predicated region
      $region33: #{tpu_custom_call.1} parent=5 // pred_check
        %p295 = pneg %p294
      $region34: #{tpu_custom_call.1} parent=5 // pred_check_branch
        %297 = sbr.rel (%p295) target = $region36
      $region35: #{tpu_custom_call.1} parent=5 // pred_region
        %s298 = ssub.s32 %s13, 2
        // Predicated region
        $region37: #{tpu_custom_call.1} parent=35 // pred_check
          %p299 = pneg %p68
        $region38: #{tpu_custom_call.1} parent=35 // pred_check_branch
          %301 = sbr.rel (%p299) target = $region40
        $region39: #{tpu_custom_call.1} parent=35 // pred_region
          %s302 = sand.u32 %s53, 1
          %s303 = scalar_lea.sflag [#allocation4], %s302
          %s304 = sand.u32 %s53, 1
          %s305 = smul.addr %s304, 64
          %s306 = scalar_lea.vmem [#allocation5], %s305
          %307 = dma.done %s303, 1024
        $region40: #{tpu_custom_call.1} parent=35 // pred_fallthru
          _
      $region36: #{tpu_custom_call.1} parent=5 // pred_fallthru
        _
    $region6: #{tpu_custom_call.1} parent=1 // loop_footer
      %s17 = sadd.s32 1, %s13
    $region7: #{tpu_custom_call.1} parent=1 // loop_footer_branch
      %12 = sbr.rel target = $region3
    $region8: #{tpu_custom_call.1} parent=1 // loop_exit
      _
    %308 = vsyncpa [#allocation3], 1
    %s309 = scalar_lea.sflag [#allocation3], 1
    %310 = vsyncpa %s309, 1
    %311 = vsyncpa [#allocation4], 1
    %s312 = scalar_lea.sflag [#allocation4], 1
    %313 = vsyncpa %s312, 1

</llo_original>
